<compile_context>
chip_gen: v7x
topology: tpu7x:2x2x1
jax: 0.10.0
libtpu: 0.0.40
codegen_flags: <defaults>
</compile_context>

<pallas_src>
import functools

import jax
import jax.numpy as jnp
from jax import lax
from jax.experimental import pallas as pl
from jax.experimental.pallas import tpu as pltpu

BN_EPS = 1e-5
_SUBLANE_PAD = 16  # bf16 sublane packing (also a multiple of the f32 sublane 8)


def _round_up(x, m):
    return (x + m - 1) // m * m


def _pick_tile_n(n):
    for tn in (512, 256, 128):
        if n % tn == 0:
            return tn
    raise ValueError(f"feature width must be a multiple of 128, got {n}")


# ---------------------------------------------------------------------------
# Kernels
# ---------------------------------------------------------------------------
def _linear_bn_relu_kernel(n_valid, x_ref, w_ref, g_ref, be_ref, o_ref):
    """One N-tile of: h = x @ W ; y = relu(BN_train(h)).

    The Linear bias is omitted: a per-feature constant shift cancels exactly
    in training-mode BatchNorm (h + b - mean(h + b) == h - mean(h)).
    """
    # bf16 operands, f32 accumulation on the MXU.
    h = jnp.dot(x_ref[...], w_ref[...], preferred_element_type=jnp.float32)

    bp = h.shape[0]
    inv_n = jnp.float32(1.0 / n_valid)
    if n_valid == bp:
        # No batch padding: plain reductions over the whole tile.
        mean = jnp.sum(h, axis=0, keepdims=True) * inv_n
        centered = h - mean
    else:
        # Masked batch statistics: only the first n_valid rows are real samples.
        rows = lax.broadcasted_iota(jnp.int32, h.shape, 0)
        mask = (rows < n_valid).astype(jnp.float32)
        mean = jnp.sum(h * mask, axis=0, keepdims=True) * inv_n
        centered = (h - mean) * mask
    var = jnp.sum(centered * centered, axis=0, keepdims=True) * inv_n  # biased

    # BN folded into one FMA per element: y = h * scale + shift.
    scale = g_ref[...] * lax.rsqrt(var + BN_EPS)
    shift = be_ref[...] - mean * scale
    o_ref[...] = jnp.maximum(h * scale + shift, 0.0).astype(o_ref.dtype)


def _linear_kernel(x_ref, w_ref, b_ref, o_ref):
    """One N-tile of the final Linear: y = x @ W + b (no BN / ReLU)."""
    h = jnp.dot(x_ref[...], w_ref[...], preferred_element_type=jnp.float32)
    o_ref[...] = (h + b_ref[...]).astype(o_ref.dtype)


# ---------------------------------------------------------------------------
# Per-layer pallas_call wrapper (weight streamed in N tiles, parallel grid)
# ---------------------------------------------------------------------------
def _linear_layer(x, w, *, bias=None, gamma=None, beta=None, n_valid, out_dtype):
    bp, k = x.shape
    kw, n = w.shape
    assert kw == k, "weight must be pre-transposed to (in_features, out_features)"
    tn = _pick_tile_n(n)
    nt = n // tn
    fuse_bn = gamma is not None

    in_specs = [
        pl.BlockSpec((bp, k), lambda j: (0, 0)),   # x resident across N tiles
        pl.BlockSpec((k, tn), lambda j: (0, j)),   # stream weight N-tiles
    ]
    if fuse_bn:
        kernel = functools.partial(_linear_bn_relu_kernel, n_valid)
        extra = (gamma, beta)
    else:
        kernel = _linear_kernel
        extra = (bias,)
    in_specs += [pl.BlockSpec((1, tn), lambda j: (0, j)) for _ in extra]

    out_itemsize = jnp.dtype(out_dtype).itemsize
    x_bytes = bp * k * x.dtype.itemsize
    w_tile_bytes = k * tn * w.dtype.itemsize
    out_tile_bytes = bp * tn * out_itemsize

    # Double-buffered windows + f32 accumulator / BN temporaries headroom.
    # Clamp to [32 MiB, 64 MiB]: explicitly above the 16 MiB (v5e) / 32 MiB
    # (v6e, v7x) scoped-VMEM defaults, below v7x's 64 MiB physical VMEM.
    need = (2 * x_bytes + 2 * w_tile_bytes + 2 * out_tile_bytes
            + 4 * bp * tn * 4 + 8 * tn * 4)
    vmem_limit = int(min(64 * 2**20, max(32 * 2**20, 2 * need)))

    cost = pl.CostEstimate(
        flops=2 * bp * k * n,
        transcendentals=n if fuse_bn else 0,
        bytes_accessed=int(x_bytes + k * n * w.dtype.itemsize
                           + len(extra) * n * 4 + bp * n * out_itemsize),
    )

    return pl.pallas_call(
        kernel,
        out_shape=jax.ShapeDtypeStruct((bp, n), out_dtype),
        grid=(nt,),
        in_specs=in_specs,
        out_specs=pl.BlockSpec((bp, tn), lambda j: (0, j)),
        compiler_params=pltpu.CompilerParams(
            dimension_semantics=("parallel",),   # N tiles independent -> megacore
            vmem_limit_bytes=vmem_limit,
        ),
        cost_estimate=cost,
    )(x, w, *extra)


# ---------------------------------------------------------------------------
# Full projector forward
# ---------------------------------------------------------------------------
def projector_forward(x, params):
    """x: (B, D) float32.  Returns (B, P) float32 (training-mode BN forward)."""
    b, d = x.shape
    p = params["w1"].shape[1]
    assert p % 128 == 0, "proj_dim must be a multiple of 128"

    # Pad the batch to a sublane/bf16-packing friendly multiple; BN statistics
    # inside the kernel are masked to the real rows.  (For real MXU utilization
    # callers should feed B >= 128/256 — the masking makes that transparent.)
    bp = _round_up(b, _SUBLANE_PAD)
    xb = x.astype(jnp.bfloat16)
    if bp != b:
        xb = jnp.pad(xb, ((0, bp - b), (0, 0)))

    # bf16 weights for the MXU (halves weight DMA).  BN params / bias stay f32.
    w1 = params["w1"].astype(jnp.bfloat16)
    w2 = params["w2"].astype(jnp.bfloat16)
    w3 = params["w3"].astype(jnp.bfloat16)

    # b1 / b2 are intentionally not passed: they cancel inside training-mode BN.
    h = _linear_layer(xb, w1, gamma=params["g1"], beta=params["be1"],
                      n_valid=b, out_dtype=jnp.bfloat16)
    h = _linear_layer(h, w2, gamma=params["g2"], beta=params["be2"],
                      n_valid=b, out_dtype=jnp.bfloat16)
    out = _linear_layer(h, w3, bias=params["b3"], n_valid=b,
                        out_dtype=jnp.float32)
    return out[:b]


# ---------------------------------------------------------------------------
# Parameters + pure-JAX reference
# ---------------------------------------------------------------------------
def init_params(key, D, P):
    """Synthetic init mirroring PyTorch shapes.

    nn.Linear(in, out): weight (out, in), bias (out,) -> stored transposed as
    (in, out) and bias as (1, out).  nn.BatchNorm1d(P): gamma=1, beta=0.
    """
    ks = jax.random.split(key, 6)

    def lin(kw, kb, fan_in, fan_out):
        bound = 1.0 / jnp.sqrt(fan_in)
        w = jax.random.uniform(kw, (fan_in, fan_out), jnp.float32, -bound, bound)
        b = jax.random.uniform(kb, (1, fan_out), jnp.float32, -bound, bound)
        return w, b

    w1, b1 = lin(ks[0], ks[1], D, P)
    w2, b2 = lin(ks[2], ks[3], P, P)
    w3, b3 = lin(ks[4], ks[5], P, P)

    g1 = jnp.ones((1, P), jnp.float32)
    be1 = jnp.zeros((1, P), jnp.float32)
    g2 = jnp.ones((1, P), jnp.float32)
    be2 = jnp.zeros((1, P), jnp.float32)

    return dict(w1=w1, b1=b1, g1=g1, be1=be1,
                w2=w2, b2=b2, g2=g2, be2=be2,
                w3=w3, b3=b3)


def projector_reference(x, p, *, bf16_operands=False):
    """Pure-JAX reference.  bf16_operands=True mirrors the kernel's matmul
    input precision (bf16 operands, f32 accumulation / BN math)."""
    cast = ((lambda a: a.astype(jnp.bfloat16).astype(jnp.float32))
            if bf16_operands else (lambda a: a))

    def bn_relu(h, g, be):
        m = jnp.mean(h, axis=0, keepdims=True)
        v = jnp.mean((h - m) ** 2, axis=0, keepdims=True)
        return jnp.maximum((h - m) * lax.rsqrt(v + BN_EPS) * g + be, 0.0)

    h = cast(x) @ cast(p["w1"]) + p["b1"]
    h = bn_relu(h, p["g1"], p["be1"])
    h = cast(h) @ cast(p["w2"]) + p["b2"]
    h = bn_relu(h, p["g2"], p["be2"])
    return cast(h) @ cast(p["w3"]) + p["b3"]


if __name__ == "__main__":
    # Small demo shapes consistent with the module (proj_dim kept a multiple of
    # 128; B=12 exercises batch padding + masked BN stats; two N tiles / layer).
    B, D, P = 12, 32, 256

    key = jax.random.PRNGKey(0)
    kx, kp = jax.random.split(key)
    x = jax.random.normal(kx, (B, D), jnp.float32)
    params = init_params(kp, D, P)

    out = jax.jit(projector_forward)(x, params)
    out = jax.block_until_ready(out)
    assert out.shape == (B, P)
    assert bool(jnp.all(jnp.isfinite(out)))

    # 1) Reference mirroring the kernel's bf16 matmul operands (tight check).
    ref_bf16 = projector_reference(x, params, bf16_operands=True)
    assert jnp.allclose(out, ref_bf16, atol=5e-2, rtol=5e-2), (
        "mismatch vs bf16-operand reference: max abs diff "
        f"{float(jnp.max(jnp.abs(out - ref_bf16)))}")

    # 2) Full-f32 PyTorch-semantics reference (loose check: bf16 MXU inputs).
    ref_f32 = projector_reference(x, params, bf16_operands=False)
    rel = float(jnp.linalg.norm(out - ref_f32) / jnp.linalg.norm(ref_f32))
    assert rel < 0.15, f"relative error vs f32 reference too large: {rel}"

    print("KERNEL_OK")
</pallas_src>

<mosaic_0001>
module attributes {stable_mosaic.version = 11 : i64} {
  func.func @_linear_bn_relu_kernel(%arg0: i32, %arg1: memref<16x32xbf16, #tpu.memory_space<vmem>>, %arg2: memref<32x256xbf16, #tpu.memory_space<vmem>>, %arg3: memref<1x256xf32, #tpu.memory_space<vmem>>, %arg4: memref<1x256xf32, #tpu.memory_space<vmem>>, %arg5: memref<16x256xbf16, #tpu.memory_space<vmem>>) attributes {dimension_semantics = [#tpu.dimension_semantics<parallel>], iteration_bounds = array<i64: 1>, scalar_prefetch = 0 : i64, scratch_operands = 0 : i64, tpu.core_type = #tpu.core_type<tc>, window_params = [{pipeline_mode = #tpu.pipeline_mode<synchronous>, transform_indices = @transform_0, window_bounds = array<i64: 16, 32>}, {transform_indices = @transform_1, window_bounds = array<i64: 32, 256>}, {transform_indices = @transform_2, window_bounds = array<i64: 1, 256>}, {transform_indices = @transform_3, window_bounds = array<i64: 1, 256>}, {transform_indices = @transform_4, window_bounds = array<i64: 16, 256>}]} {
    %c0 = arith.constant 0 : index
    %c0_0 = arith.constant 0 : index
    %0 = vector.load %arg1[%c0, %c0_0] : memref<16x32xbf16, #tpu.memory_space<vmem>>, vector<16x32xbf16>
    %c0_1 = arith.constant 0 : index
    %c0_2 = arith.constant 0 : index
    %1 = vector.load %arg2[%c0_1, %c0_2] : memref<32x256xbf16, #tpu.memory_space<vmem>>, vector<32x256xbf16>
    %cst = arith.constant dense<0.000000e+00> : vector<16x256xf32>
    %2 = tpu.matmul %0, %1, %cst {dimension_numbers = #tpu.dot_dimension_numbers<[1], [0], [0], [1], [0, 0, 1, 1], [], []>} : vector<16x32xbf16>, vector<32x256xbf16>, vector<16x256xf32> -> vector<16x256xf32>
    %3 = tpu.iota {dimensions = array<i32: 0>} : vector<16x256xi32>
    %c12_i32 = arith.constant 12 : i32
    %4 = vector.broadcast %c12_i32 : i32 to vector<16x256xi32>
    %5 = arith.cmpi slt, %3, %4 : vector<16x256xi32>
    %6 = arith.extui %5 : vector<16x256xi1> to vector<16x256xi32>
    %7 = arith.sitofp %6 : vector<16x256xi32> to vector<16x256xf32>
    %8 = arith.mulf %2, %7 : vector<16x256xf32>
    %cst_3 = arith.constant dense<0.000000e+00> : vector<256xf32>
    %9 = vector.multi_reduction <add>, %8, %cst_3 [0] : vector<16x256xf32> to vector<256xf32>
    %10 = vector.shape_cast %9 : vector<256xf32> to vector<1x256xf32>
    %cst_4 = arith.constant 0.0833333358 : f32
    %11 = vector.broadcast %cst_4 : f32 to vector<1x256xf32>
    %12 = arith.mulf %10, %11 : vector<1x256xf32>
    %13 = vector.broadcast %12 : vector<1x256xf32> to vector<16x256xf32>
    %14 = arith.subf %2, %13 : vector<16x256xf32>
    %15 = arith.mulf %14, %7 : vector<16x256xf32>
    %16 = arith.mulf %15, %15 : vector<16x256xf32>
    %cst_5 = arith.constant dense<0.000000e+00> : vector<256xf32>
    %17 = vector.multi_reduction <add>, %16, %cst_5 [0] : vector<16x256xf32> to vector<256xf32>
    %18 = vector.shape_cast %17 : vector<256xf32> to vector<1x256xf32>
    %cst_6 = arith.constant 0.0833333358 : f32
    %19 = vector.broadcast %cst_6 : f32 to vector<1x256xf32>
    %20 = arith.mulf %18, %19 : vector<1x256xf32>
    %c0_7 = arith.constant 0 : index
    %c0_8 = arith.constant 0 : index
    %21 = vector.load %arg3[%c0_7, %c0_8] : memref<1x256xf32, #tpu.memory_space<vmem>>, vector<1x256xf32>
    %cst_9 = arith.constant 9.99999974E-6 : f32
    %22 = vector.broadcast %cst_9 : f32 to vector<1x256xf32>
    %23 = arith.addf %20, %22 : vector<1x256xf32>
    %24 = math.rsqrt %23 : vector<1x256xf32>
    %25 = arith.mulf %21, %24 : vector<1x256xf32>
    %c0_10 = arith.constant 0 : index
    %c0_11 = arith.constant 0 : index
    %26 = vector.load %arg4[%c0_10, %c0_11] : memref<1x256xf32, #tpu.memory_space<vmem>>, vector<1x256xf32>
    %27 = arith.mulf %12, %25 : vector<1x256xf32>
    %28 = arith.subf %26, %27 : vector<1x256xf32>
    %29 = vector.broadcast %25 : vector<1x256xf32> to vector<16x256xf32>
    %30 = arith.mulf %2, %29 : vector<16x256xf32>
    %31 = vector.broadcast %28 : vector<1x256xf32> to vector<16x256xf32>
    %32 = arith.addf %30, %31 : vector<16x256xf32>
    %cst_12 = arith.constant 0.000000e+00 : f32
    %33 = vector.broadcast %cst_12 : f32 to vector<16x256xf32>
    %34 = arith.maximumf %32, %33 : vector<16x256xf32>
    %35 = arith.truncf %34 : vector<16x256xf32> to vector<16x256xbf16>
    %c0_13 = arith.constant 0 : index
    %c0_14 = arith.constant 0 : index
    %36 = vector.load %arg5[%c0_13, %c0_14] : memref<16x256xbf16, #tpu.memory_space<vmem>>, vector<16x256xbf16>
    tpu.vector_store %arg5[%c0_13, %c0_14], %35 {strides = array<i32>} : memref<16x256xbf16, #tpu.memory_space<vmem>>, vector<16x256xbf16>,
    return
  }
  func.func @transform_0(%arg0: i32) -> (i32, i32) {
    %c0_i32 = arith.constant 0 : i32
    %c0_i32_0 = arith.constant 0 : i32
    %c0_i32_1 = arith.constant 0 : i32
    return %c0_i32, %c0_i32_0 : i32, i32
  }
  func.func @transform_1(%arg0: i32) -> (i32, i32) {
    %c0_i32 = arith.constant 0 : i32
    %c0_i32_0 = arith.constant 0 : i32
    return %c0_i32, %arg0 : i32, i32
  }
  func.func @transform_2(%arg0: i32) -> (i32, i32) {
    %c0_i32 = arith.constant 0 : i32
    %c0_i32_0 = arith.constant 0 : i32
    return %c0_i32, %arg0 : i32, i32
  }
  func.func @transform_3(%arg0: i32) -> (i32, i32) {
    %c0_i32 = arith.constant 0 : i32
    %c0_i32_0 = arith.constant 0 : i32
    return %c0_i32, %arg0 : i32, i32
  }
  func.func @transform_4(%arg0: i32) -> (i32, i32) {
    %c0_i32 = arith.constant 0 : i32
    %c0_i32_0 = arith.constant 0 : i32
    return %c0_i32, %arg0 : i32, i32
  }
}

module attributes {stable_mosaic.version = 11 : i64} {
  func.func @_linear_bn_relu_kernel(%arg0: i32, %arg1: memref<16x256xbf16, #tpu.memory_space<vmem>>, %arg2: memref<256x256xbf16, #tpu.memory_space<vmem>>, %arg3: memref<1x256xf32, #tpu.memory_space<vmem>>, %arg4: memref<1x256xf32, #tpu.memory_space<vmem>>, %arg5: memref<16x256xbf16, #tpu.memory_space<vmem>>) attributes {dimension_semantics = [#tpu.dimension_semantics<parallel>], iteration_bounds = array<i64: 1>, scalar_prefetch = 0 : i64, scratch_operands = 0 : i64, tpu.core_type = #tpu.core_type<tc>, window_params = [{pipeline_mode = #tpu.pipeline_mode<synchronous>, transform_indices = @transform_0, window_bounds = array<i64: 16, 256>}, {transform_indices = @transform_1, window_bounds = array<i64: 256, 256>}, {transform_indices = @transform_2, window_bounds = array<i64: 1, 256>}, {transform_indices = @transform_3, window_bounds = array<i64: 1, 256>}, {transform_indices = @transform_4, window_bounds = array<i64: 16, 256>}]} {
    %c0 = arith.constant 0 : index
    %c0_0 = arith.constant 0 : index
    %0 = vector.load %arg1[%c0, %c0_0] : memref<16x256xbf16, #tpu.memory_space<vmem>>, vector<16x256xbf16>
    %c0_1 = arith.constant 0 : index
    %c0_2 = arith.constant 0 : index
    %1 = vector.load %arg2[%c0_1, %c0_2] : memref<256x256xbf16, #tpu.memory_space<vmem>>, vector<256x256xbf16>
    %cst = arith.constant dense<0.000000e+00> : vector<16x256xf32>
    %2 = tpu.matmul %0, %1, %cst {dimension_numbers = #tpu.dot_dimension_numbers<[1], [0], [0], [1], [0, 0, 1, 1], [], []>} : vector<16x256xbf16>, vector<256x256xbf16>, vector<16x256xf32> -> vector<16x256xf32>
    %3 = tpu.iota {dimensions = array<i32: 0>} : vector<16x256xi32>
    %c12_i32 = arith.constant 12 : i32
    %4 = vector.broadcast %c12_i32 : i32 to vector<16x256xi32>
    %5 = arith.cmpi slt, %3, %4 : vector<16x256xi32>
    %6 = arith.extui %5 : vector<16x256xi1> to vector<16x256xi32>
    %7 = arith.sitofp %6 : vector<16x256xi32> to vector<16x256xf32>
    %8 = arith.mulf %2, %7 : vector<16x256xf32>
    %cst_3 = arith.constant dense<0.000000e+00> : vector<256xf32>
    %9 = vector.multi_reduction <add>, %8, %cst_3 [0] : vector<16x256xf32> to vector<256xf32>
    %10 = vector.shape_cast %9 : vector<256xf32> to vector<1x256xf32>
    %cst_4 = arith.constant 0.0833333358 : f32
    %11 = vector.broadcast %cst_4 : f32 to vector<1x256xf32>
    %12 = arith.mulf %10, %11 : vector<1x256xf32>
    %13 = vector.broadcast %12 : vector<1x256xf32> to vector<16x256xf32>
    %14 = arith.subf %2, %13 : vector<16x256xf32>
    %15 = arith.mulf %14, %7 : vector<16x256xf32>
    %16 = arith.mulf %15, %15 : vector<16x256xf32>
    %cst_5 = arith.constant dense<0.000000e+00> : vector<256xf32>
    %17 = vector.multi_reduction <add>, %16, %cst_5 [0] : vector<16x256xf32> to vector<256xf32>
    %18 = vector.shape_cast %17 : vector<256xf32> to vector<1x256xf32>
    %cst_6 = arith.constant 0.0833333358 : f32
    %19 = vector.broadcast %cst_6 : f32 to vector<1x256xf32>
    %20 = arith.mulf %18, %19 : vector<1x256xf32>
    %c0_7 = arith.constant 0 : index
    %c0_8 = arith.constant 0 : index
    %21 = vector.load %arg3[%c0_7, %c0_8] : memref<1x256xf32, #tpu.memory_space<vmem>>, vector<1x256xf32>
    %cst_9 = arith.constant 9.99999974E-6 : f32
    %22 = vector.broadcast %cst_9 : f32 to vector<1x256xf32>
    %23 = arith.addf %20, %22 : vector<1x256xf32>
    %24 = math.rsqrt %23 : vector<1x256xf32>
    %25 = arith.mulf %21, %24 : vector<1x256xf32>
    %c0_10 = arith.constant 0 : index
    %c0_11 = arith.constant 0 : index
    %26 = vector.load %arg4[%c0_10, %c0_11] : memref<1x256xf32, #tpu.memory_space<vmem>>, vector<1x256xf32>
    %27 = arith.mulf %12, %25 : vector<1x256xf32>
    %28 = arith.subf %26, %27 : vector<1x256xf32>
    %29 = vector.broadcast %25 : vector<1x256xf32> to vector<16x256xf32>
    %30 = arith.mulf %2, %29 : vector<16x256xf32>
    %31 = vector.broadcast %28 : vector<1x256xf32> to vector<16x256xf32>
    %32 = arith.addf %30, %31 : vector<16x256xf32>
    %cst_12 = arith.constant 0.000000e+00 : f32
    %33 = vector.broadcast %cst_12 : f32 to vector<16x256xf32>
    %34 = arith.maximumf %32, %33 : vector<16x256xf32>
    %35 = arith.truncf %34 : vector<16x256xf32> to vector<16x256xbf16>
    %c0_13 = arith.constant 0 : index
    %c0_14 = arith.constant 0 : index
    %36 = vector.load %arg5[%c0_13, %c0_14] : memref<16x256xbf16, #tpu.memory_space<vmem>>, vector<16x256xbf16>
    tpu.vector_store %arg5[%c0_13, %c0_14], %35 {strides = array<i32>} : memref<16x256xbf16, #tpu.memory_space<vmem>>, vector<16x256xbf16>,
    return
  }
  func.func @transform_0(%arg0: i32) -> (i32, i32) {
    %c0_i32 = arith.constant 0 : i32
    %c0_i32_0 = arith.constant 0 : i32
    %c0_i32_1 = arith.constant 0 : i32
    return %c0_i32, %c0_i32_0 : i32, i32
  }
  func.func @transform_1(%arg0: i32) -> (i32, i32) {
    %c0_i32 = arith.constant 0 : i32
    %c0_i32_0 = arith.constant 0 : i32
    return %c0_i32, %arg0 : i32, i32
  }
  func.func @transform_2(%arg0: i32) -> (i32, i32) {
    %c0_i32 = arith.constant 0 : i32
    %c0_i32_0 = arith.constant 0 : i32
    return %c0_i32, %arg0 : i32, i32
  }
  func.func @transform_3(%arg0: i32) -> (i32, i32) {
    %c0_i32 = arith.constant 0 : i32
    %c0_i32_0 = arith.constant 0 : i32
    return %c0_i32, %arg0 : i32, i32
  }
  func.func @transform_4(%arg0: i32) -> (i32, i32) {
    %c0_i32 = arith.constant 0 : i32
    %c0_i32_0 = arith.constant 0 : i32
    return %c0_i32, %arg0 : i32, i32
  }
}

module attributes {stable_mosaic.version = 11 : i64} {
  func.func @_linear_kernel(%arg0: i32, %arg1: memref<16x256xbf16, #tpu.memory_space<vmem>>, %arg2: memref<256x256xbf16, #tpu.memory_space<vmem>>, %arg3: memref<1x256xf32, #tpu.memory_space<vmem>>, %arg4: memref<16x256xf32, #tpu.memory_space<vmem>>) attributes {dimension_semantics = [#tpu.dimension_semantics<parallel>], iteration_bounds = array<i64: 1>, scalar_prefetch = 0 : i64, scratch_operands = 0 : i64, tpu.core_type = #tpu.core_type<tc>, window_params = [{pipeline_mode = #tpu.pipeline_mode<synchronous>, transform_indices = @transform_0, window_bounds = array<i64: 16, 256>}, {transform_indices = @transform_1, window_bounds = array<i64: 256, 256>}, {transform_indices = @transform_2, window_bounds = array<i64: 1, 256>}, {transform_indices = @transform_3, window_bounds = array<i64: 16, 256>}]} {
    %c0 = arith.constant 0 : index
    %c0_0 = arith.constant 0 : index
    %0 = vector.load %arg1[%c0, %c0_0] : memref<16x256xbf16, #tpu.memory_space<vmem>>, vector<16x256xbf16>
    %c0_1 = arith.constant 0 : index
    %c0_2 = arith.constant 0 : index
    %1 = vector.load %arg2[%c0_1, %c0_2] : memref<256x256xbf16, #tpu.memory_space<vmem>>, vector<256x256xbf16>
    %cst = arith.constant dense<0.000000e+00> : vector<16x256xf32>
    %2 = tpu.matmul %0, %1, %cst {dimension_numbers = #tpu.dot_dimension_numbers<[1], [0], [0], [1], [0, 0, 1, 1], [], []>} : vector<16x256xbf16>, vector<256x256xbf16>, vector<16x256xf32> -> vector<16x256xf32>
    %c0_3 = arith.constant 0 : index
    %c0_4 = arith.constant 0 : index
    %3 = vector.load %arg3[%c0_3, %c0_4] : memref<1x256xf32, #tpu.memory_space<vmem>>, vector<1x256xf32>
    %4 = vector.broadcast %3 : vector<1x256xf32> to vector<16x256xf32>
    %5 = arith.addf %2, %4 : vector<16x256xf32>
    %c0_5 = arith.constant 0 : index
    %c0_6 = arith.constant 0 : index
    %6 = vector.load %arg4[%c0_5, %c0_6] : memref<16x256xf32, #tpu.memory_space<vmem>>, vector<16x256xf32>
    tpu.vector_store %arg4[%c0_5, %c0_6], %5 {strides = array<i32>} : memref<16x256xf32, #tpu.memory_space<vmem>>, vector<16x256xf32>,
    return
  }
  func.func @transform_0(%arg0: i32) -> (i32, i32) {
    %c0_i32 = arith.constant 0 : i32
    %c0_i32_0 = arith.constant 0 : i32
    %c0_i32_1 = arith.constant 0 : i32
    return %c0_i32, %c0_i32_0 : i32, i32
  }
  func.func @transform_1(%arg0: i32) -> (i32, i32) {
    %c0_i32 = arith.constant 0 : i32
    %c0_i32_0 = arith.constant 0 : i32
    return %c0_i32, %arg0 : i32, i32
  }
  func.func @transform_2(%arg0: i32) -> (i32, i32) {
    %c0_i32 = arith.constant 0 : i32
    %c0_i32_0 = arith.constant 0 : i32
    return %c0_i32, %arg0 : i32, i32
  }
  func.func @transform_3(%arg0: i32) -> (i32, i32) {
    %c0_i32 = arith.constant 0 : i32
    %c0_i32_0 = arith.constant 0 : i32
    return %c0_i32, %arg0 : i32, i32
  }
}

</mosaic_0001>

<llo_original>
// kernel: projector_forward.3
$region0: #{projector_forward.3}
  #allocation0 [shape = 'u32[]', space=smem, size = 0x4, offset = 0x4, fixed_abs, tag = 'smem constant byte address 0x4 - core index']
  #allocation1 [shape = 'u32[144,128]{1,0:T(1,128)}', space=vmem, size = 0x12000, scoped, tag = 'internal scratch']
  %s0 = inlined_call_operand.vmem [shape: bf16[16,32], index: 0, kind: input, shape index: {}]
  %s1 = inlined_call_operand.vmem [shape: bf16[32,256], index: 1, kind: input, shape index: {}]
  %s2 = inlined_call_operand.vmem [shape: f32[1,256], index: 2, kind: input, shape index: {}]
  %s3 = inlined_call_operand.vmem [shape: f32[1,256], index: 3, kind: input, shape index: {}]
  %s4 = inlined_call_operand.vmem [shape: bf16[16,256], index: 4, kind: output, shape index: {}]
  %s5 = sld [smem:[#allocation0]]
  $region26: #{projector_forward.3} parent=0
    _
  %s7 = ssub.s32 1, %s5
  %s8 = scalar_select 0, %s7, %s5
  // Predicated region
  $region2: #{projector_forward.3} parent=0 // pred_check
    _
  $region3: #{projector_forward.3} parent=0 // pred_check_branch
    %10 = sbr.rel (0) target = $region5
  $region4: #{projector_forward.3} parent=0 // pred_region
    _
  $region5: #{projector_forward.3} parent=0 // pred_fallthru
    _
  // Predicated region
  $region6: #{projector_forward.3} parent=0 // pred_check
    _
  $region7: #{projector_forward.3} parent=0 // pred_check_branch
    %12 = sbr.rel (0) target = $region9
  $region8: #{projector_forward.3} parent=0 // pred_region
    _
  $region9: #{projector_forward.3} parent=0 // pred_fallthru
    _
  // Predicated region
  $region10: #{projector_forward.3} parent=0 // pred_check
    _
  $region11: #{projector_forward.3} parent=0 // pred_check_branch
    %14 = sbr.rel (0) target = $region13
  $region12: #{projector_forward.3} parent=0 // pred_region
    _
  $region13: #{projector_forward.3} parent=0 // pred_fallthru
    _
  // Predicated region
  $region14: #{projector_forward.3} parent=0 // pred_check
    _
  $region15: #{projector_forward.3} parent=0 // pred_check_branch
    %16 = sbr.rel (0) target = $region17
  $region16: #{projector_forward.3} parent=0 // pred_region
    _
  $region17: #{projector_forward.3} parent=0 // pred_fallthru
    _
  %v18 = vld [vmem:[%s0] sm:$0xf]
  %v19 = vld [vmem:[%s0 + $0x4] sm:$0xf]
  %v20 = vld [vmem:[%s1] sm:$0xff]
  %v21 = vld [vmem:[%s1 + $0x8] sm:$0xff]
  %v22 = vld [vmem:[%s1 + $0x10] sm:$0xff]
  %v23 = vld [vmem:[%s1 + $0x18] sm:$0xff]
  %v26 = vunpack.c.l.b16 %v18
  %v27 = vunpack.c.l.b16 %v19
  %v28 = vpack.c.b16 %v27, %v26
  %v33 = vunpack.c.l.b16 %v20
  %v34 = vunpack.c.h.b16 %v20
  %v35 = vunpack.c.l.b16 %v21
  %v36 = vunpack.c.h.b16 %v21
  %v37 = vunpack.c.l.b16 %v22
  %v38 = vunpack.c.h.b16 %v22
  %v39 = vunpack.c.l.b16 %v23
  %v40 = vunpack.c.h.b16 %v23
  %v41 = vpack.c.b16 %v35, %v33
  %v42 = vpack.c.b16 %v36, %v34
  %v43 = vpack.c.b16 %v39, %v37
  %v44 = vpack.c.b16 %v40, %v38
  %vm49 = vcmask 261120
  %v51 = vsel %vm49, %v28, 0
  %53 = vmatprep.subr.bf16.mxu0 %v42
  %54 = vmatpush1.bf16.msra.mxu0 %v41
  %55 = vmatprep.subr.bf16.mxu0 %v44
  %56 = vmatpush1.bf16.msra.mxu0 %v43
  %57 = vmatprep.subr.bf16.mxu0 0
  %58 = vmatpush1.bf16.msra.mxu0 0
  %59 = vmatprep.subr.bf16.mxu0 0
  %60 = vmatpush1.bf16.msra.mxu0 0
  %61 = vmatprep.subr.bf16.mxu0 0
  %62 = vmatpush1.bf16.msra.mxu0 0
  %63 = vmatprep.subr.bf16.mxu0 0
  %64 = vmatpush1.bf16.msra.mxu0 0
  %65 = vmatprep.subr.bf16.mxu0 0
  %66 = vmatpush1.bf16.msra.mxu0 0
  %67 = vmatprep.subr.bf16.mxu0 0
  %68 = vmatpush1.bf16.msra.mxu0 0
  %69 = vmatprep.subr.bf16.mxu0 0
  %70 = vmatpush1.bf16.msra.mxu0 0
  %71 = vmatprep.subr.bf16.mxu0 0
  %72 = vmatpush1.bf16.msra.mxu0 0
  %73 = vmatprep.subr.bf16.mxu0 0
  %74 = vmatpush1.bf16.msra.mxu0 0
  %75 = vmatprep.subr.bf16.mxu0 0
  %76 = vmatpush1.bf16.msra.mxu0 0
  %77 = vmatprep.subr.bf16.mxu0 0
  %78 = vmatpush1.bf16.msra.mxu0 0
  %79 = vmatprep.subr.bf16.mxu0 0
  %80 = vmatpush1.bf16.msra.mxu0 0
  %81 = vmatprep.subr.bf16.mxu0 0
  %82 = vmatpush1.bf16.msra.mxu0 0
  %83 = vmatprep.subr.bf16.mxu0 0
  %84 = vmatpush1.bf16.msra.mxu0 0
  %85 = vmatprep.mubr.bf16.mxu0 0
  %86 = vmatmul.mubr.bf16.gmra.mrb[0].mxu0 %v51
  %v87 = vpop.f32.mrb[0].mxu0
  %v88 = vadd.f32 0.0, %v87
  %v89 = vpop.f32.mrb[0].mxu0
  %v90 = vadd.f32 0.0, %v89
  %v91 = vpop.f32.mrb[0].mxu0
  %v92 = vadd.f32 0.0, %v91
  %v93 = vpop.f32.mrb[0].mxu0
  %v94 = vadd.f32 0.0, %v93
  %95 = vdwg.mxu0
  %v96 = vlaneseq
  %v97 = vshrl.u32 %v96, 7
  %v98 = vadd.s32 %v97, 8
  %vm99 = vcmp.lt.s32.totalorder %v97, 12
  %vm100 = vcmp.lt.s32.totalorder %v98, 12
  %v101 = vsel %vm99, 1, 0
  %v102 = vsel %vm100, 1, 0
  %v103 = vcvt.s32.f32 %v101
  %v104 = vcvt.s32.f32 %v102
  %v105 = vmul.f32 %v88, %v103
  %v106 = vmul.f32 %v90, %v103
  %v107 = vmul.f32 %v92, %v104
  %v108 = vmul.f32 %v94, %v104
  %v109 = vadd.f32 %v105, %v107
  %v110 = vrot.slane %v109, 4
  %v111 = vadd.f32 %v109, %v110
  %v112 = vrot.slane %v111, 2
  %v113 = vadd.f32 %v111, %v112
  %v114 = vrot.slane %v113, 1
  %v115 = vadd.f32 %v113, %v114
  %v116 = vadd.f32 %v106, %v108
  %v117 = vrot.slane %v116, 4
  %v118 = vadd.f32 %v116, %v117
  %v119 = vrot.slane %v118, 2
  %v120 = vadd.f32 %v118, %v119
  %v121 = vrot.slane %v120, 1
  %v122 = vadd.f32 %v120, %v121
  %v123 = vmul.f32 %v115, 0.083333336
  %v124 = vmul.f32 %v122, 0.083333336
  %v125 = vsub.f32 %v88, %v123
  %v126 = vsub.f32 %v90, %v124
  %v127 = vsub.f32 %v92, %v123
  %v128 = vsub.f32 %v94, %v124
  %v129 = vmul.f32 %v125, %v103
  %v130 = vmul.f32 %v126, %v103
  %v131 = vmul.f32 %v127, %v104
  %v132 = vmul.f32 %v128, %v104
  %v133 = vmul.f32 %v129, %v129
  %v134 = vmul.f32 %v130, %v130
  %v135 = vmul.f32 %v131, %v131
  %v136 = vmul.f32 %v132, %v132
  %v137 = vadd.f32 %v133, %v135
  %v138 = vrot.slane %v137, 4
  %v139 = vadd.f32 %v137, %v138
  %v140 = vrot.slane %v139, 2
  %v141 = vadd.f32 %v139, %v140
  %v142 = vrot.slane %v141, 1
  %v143 = vadd.f32 %v141, %v142
  %v144 = vadd.f32 %v134, %v136
  %v145 = vrot.slane %v144, 4
  %v146 = vadd.f32 %v144, %v145
  %v147 = vrot.slane %v146, 2
  %v148 = vadd.f32 %v146, %v147
  %v149 = vrot.slane %v148, 1
  %v150 = vadd.f32 %v148, %v149
  %v151 = vmul.f32 %v143, 0.083333336
  %v152 = vmul.f32 %v150, 0.083333336
  %v153 = vld [vmem:[%s2] sm:$0x3]
  %v154 = vadd.f32 %v151, 1e-05
  %v155 = vadd.f32 %v152, 1e-05
  %v156 = vrsqrt.pop %v154
  %v157 = vrsqrt.pop %v155
  %v160 = vcombine.low %v156, %v157
  %v162 = vunpack.c.l.s4 1966171168
  %v163 = vunpack.c.0.s8 %v162
  %v164 = vlaneseq
  %v165 = vshrl.u32 %v164, 7
  %v166 = vsub.s32 %v163, %v165
  %v167 = vrot.slane %v160, %v166
  %v169 = vunpack.c.l.s4 1966171168
  %v170 = vunpack.c.0.s8 %v169
  %v171 = vlaneseq
  %v172 = vshrl.u32 %v171, 7
  %v173 = vsub.s32 %v170, %v172
  %v174 = vrot.slane %v167, %v173
  %v176 = vmul.f32 %v153, %v174
  %v177 = vld [vmem:[%s3] sm:$0x3]
  %v179 = vlaneseq
  %v180 = vshrl.u32 %v179, 7
  %v181 = vsub.s32 0, %v180
  %v182 = vrot.slane %v176, %v181
  %v183 = vlaneseq
  %v184 = vshrl.u32 %v183, 7
  %v185 = vsub.s32 1, %v184
  %v186 = vrot.slane %v176, %v185
  %v189 = vmul.f32 %v123, %v182
  %v190 = vmul.f32 %v124, %v186
  %v193 = vcombine.low %v189, %v190
  %v195 = vunpack.c.l.s4 1966171168
  %v196 = vunpack.c.0.s8 %v195
  %v197 = vlaneseq
  %v198 = vshrl.u32 %v197, 7
  %v199 = vsub.s32 %v196, %v198
  %v200 = vrot.slane %v193, %v199
  %v202 = vunpack.c.l.s4 1966171168
  %v203 = vunpack.c.0.s8 %v202
  %v204 = vlaneseq
  %v205 = vshrl.u32 %v204, 7
  %v206 = vsub.s32 %v203, %v205
  %v207 = vrot.slane %v200, %v206
  %v209 = vsub.f32 %v177, %v207
  %v210 = vmul.f32 %v88, %v182
  %v211 = vmul.f32 %v90, %v186
  %v212 = vmul.f32 %v92, %v182
  %v213 = vmul.f32 %v94, %v186
  %v215 = vlaneseq
  %v216 = vshrl.u32 %v215, 7
  %v217 = vsub.s32 0, %v216
  %v218 = vrot.slane %v209, %v217
  %v219 = vlaneseq
  %v220 = vshrl.u32 %v219, 7
  %v221 = vsub.s32 1, %v220
  %v222 = vrot.slane %v209, %v221
  %v225 = vadd.f32 %v210, %v218
  %v226 = vadd.f32 %v211, %v222
  %v227 = vadd.f32 %v212, %v218
  %v228 = vadd.f32 %v213, %v222
  %v229 = vmax.f32 %v225, 0.0
  %v230 = vmax.f32 %v226, 0.0
  %v231 = vmax.f32 %v227, 0.0
  %v232 = vmax.f32 %v228, 0.0
  %v233 = vpack.c.bf16 %v231, %v229
  %v234 = vpack.c.bf16 %v232, %v230
  %v237 = vunpack.c.l.b16 %v233
  %v238 = vunpack.c.l.b16 %v234
  %v239 = vunpack.c.h.b16 %v233
  %v240 = vunpack.c.h.b16 %v234
  %v241 = vpack.c.b16 %v238, %v237
  %v242 = vpack.c.b16 %v240, %v239
  %245 = vst [vmem:[%s4] sm:$0xff] %v241
  %246 = vst [vmem:[%s4 + $0x8] sm:$0xff] %v242
  // Predicated region
  $region18: #{projector_forward.3} parent=0 // pred_check
    _
  $region19: #{projector_forward.3} parent=0 // pred_check_branch
    %248 = sbr.rel (0) target = $region21
  $region20: #{projector_forward.3} parent=0 // pred_region
    _
  $region21: #{projector_forward.3} parent=0 // pred_fallthru
    _
  // Predicated region
  $region22: #{projector_forward.3} parent=0 // pred_check
    _
  $region23: #{projector_forward.3} parent=0 // pred_check_branch
    %250 = sbr.rel (0) target = $region25
  $region24: #{projector_forward.3} parent=0 // pred_region
    _
  $region25: #{projector_forward.3} parent=0 // pred_fallthru
    _

// kernel: projector_forward.5
$region0: #{projector_forward.5}
  #allocation0 [shape = 'u32[]', space=smem, size = 0x4, offset = 0x4, fixed_abs, tag = 'smem constant byte address 0x4 - core index']
  #allocation1 [shape = 'u32[144,128]{1,0:T(1,128)}', space=vmem, size = 0x12000, scoped, tag = 'internal scratch']
  %s0 = inlined_call_operand.vmem [shape: bf16[16,256], index: 0, kind: input, shape index: {}]
  %s1 = inlined_call_operand.vmem [shape: bf16[256,256], index: 1, kind: input, shape index: {}]
  %s2 = inlined_call_operand.vmem [shape: f32[1,256], index: 2, kind: input, shape index: {}]
  %s3 = inlined_call_operand.hbm [shape: f32[16,256], index: 3, kind: output, shape index: {}]
  %s4 = sld [smem:[#allocation0]]
  $region22: #{projector_forward.5} parent=0
    _
  %s6 = ssub.s32 1, %s4
  %s7 = scalar_select 0, %s6, %s4
  $region1: #{projector_forward.5} parent=0
    #allocation2 [shape = 'u8[16384]{0}', space=vmem, size = 0x4000, scoped, tag = 'output window, operand 0, single buffered']
    #allocation3 [shape = 's32[1]{0}', space=sflag, size = 0x4, scoped, tag = 'scoped memory for projector_forward.5']
    %8 = vsyncpa [#allocation3], 0
    // Predicated region
    $region2: #{projector_forward.5} parent=1 // pred_check
      _
    $region3: #{projector_forward.5} parent=1 // pred_check_branch
      %10 = sbr.rel (0) target = $region5
    $region4: #{projector_forward.5} parent=1 // pred_region
      _
    $region5: #{projector_forward.5} parent=1 // pred_fallthru
      _
    // Predicated region
    $region6: #{projector_forward.5} parent=1 // pred_check
      _
    $region7: #{projector_forward.5} parent=1 // pred_check_branch
      %12 = sbr.rel (0) target = $region9
    $region8: #{projector_forward.5} parent=1 // pred_region
      _
    $region9: #{projector_forward.5} parent=1 // pred_fallthru
      _
    // Predicated region
    $region10: #{projector_forward.5} parent=1 // pred_check
      _
    $region11: #{projector_forward.5} parent=1 // pred_check_branch
      %14 = sbr.rel (0) target = $region13
    $region12: #{projector_forward.5} parent=1 // pred_region
      _
    $region13: #{projector_forward.5} parent=1 // pred_fallthru
      _
    %v15 = vld [vmem:[%s0] sm:$0xff]
    %v16 = vld [vmem:[%s0 + $0x8] sm:$0xff]
    %v17 = vld [vmem:[%s1] sm:$0xff]
    %v18 = vld [vmem:[%s1 + $0x8] sm:$0xff]
    %v19 = vld [vmem:[%s1 + $0x10] sm:$0xff]
    %v20 = vld [vmem:[%s1 + $0x18] sm:$0xff]
    %v21 = vld [vmem:[%s1 + $0x20] sm:$0xff]
    %v22 = vld [vmem:[%s1 + $0x28] sm:$0xff]
    %v23 = vld [vmem:[%s1 + $0x30] sm:$0xff]
    %v24 = vld [vmem:[%s1 + $0x38] sm:$0xff]
    %v25 = vld [vmem:[%s1 + $0x40] sm:$0xff]
    %v26 = vld [vmem:[%s1 + $0x48] sm:$0xff]
    %v27 = vld [vmem:[%s1 + $0x50] sm:$0xff]
    %v28 = vld [vmem:[%s1 + $0x58] sm:$0xff]
    %v29 = vld [vmem:[%s1 + $0x60] sm:$0xff]
    %v30 = vld [vmem:[%s1 + $0x68] sm:$0xff]
    %v31 = vld [vmem:[%s1 + $0x70] sm:$0xff]
    %v32 = vld [vmem:[%s1 + $0x78] sm:$0xff]
    %v33 = vld [vmem:[%s1 + $0x80] sm:$0xff]
    %v34 = vld [vmem:[%s1 + $0x88] sm:$0xff]
    %v35 = vld [vmem:[%s1 + $0x90] sm:$0xff]
    %v36 = vld [vmem:[%s1 + $0x98] sm:$0xff]
    %v37 = vld [vmem:[%s1 + $0xa0] sm:$0xff]
    %v38 = vld [vmem:[%s1 + $0xa8] sm:$0xff]
    %v39 = vld [vmem:[%s1 + $0xb0] sm:$0xff]
    %v40 = vld [vmem:[%s1 + $0xb8] sm:$0xff]
    %v41 = vld [vmem:[%s1 + $0xc0] sm:$0xff]
    %v42 = vld [vmem:[%s1 + $0xc8] sm:$0xff]
    %v43 = vld [vmem:[%s1 + $0xd0] sm:$0xff]
    %v44 = vld [vmem:[%s1 + $0xd8] sm:$0xff]
    %v45 = vld [vmem:[%s1 + $0xe0] sm:$0xff]
    %v46 = vld [vmem:[%s1 + $0xe8] sm:$0xff]
    %v47 = vld [vmem:[%s1 + $0xf0] sm:$0xff]
    %v48 = vld [vmem:[%s1 + $0xf8] sm:$0xff]
    %v49 = vld [vmem:[%s2] sm:$0x3]
    %v51 = vlaneseq
    %v52 = vshrl.u32 %v51, 7
    %v53 = vsub.s32 0, %v52
    %v54 = vrot.slane %v49, %v53
    %v55 = vlaneseq
    %v56 = vshrl.u32 %v55, 7
    %v57 = vsub.s32 1, %v56
    %v58 = vrot.slane %v49, %v57
    %v63 = vunpack.c.l.b16 %v15
    %v64 = vunpack.c.h.b16 %v15
    %v65 = vunpack.c.l.b16 %v16
    %v66 = vunpack.c.h.b16 %v16
    %v67 = vpack.c.b16 %v65, %v63
    %v68 = vpack.c.b16 %v66, %v64
    %v103 = vunpack.c.l.b16 %v17
    %v104 = vunpack.c.h.b16 %v17
    %v105 = vunpack.c.l.b16 %v18
    %v106 = vunpack.c.h.b16 %v18
    %v107 = vunpack.c.l.b16 %v19
    %v108 = vunpack.c.h.b16 %v19
    %v109 = vunpack.c.l.b16 %v20
    %v110 = vunpack.c.h.b16 %v20
    %v111 = vunpack.c.l.b16 %v21
    %v112 = vunpack.c.h.b16 %v21
    %v113 = vunpack.c.l.b16 %v22
    %v114 = vunpack.c.h.b16 %v22
    %v115 = vunpack.c.l.b16 %v23
    %v116 = vunpack.c.h.b16 %v23
    %v117 = vunpack.c.l.b16 %v24
    %v118 = vunpack.c.h.b16 %v24
    %v119 = vunpack.c.l.b16 %v25
    %v120 = vunpack.c.h.b16 %v25
    %v121 = vunpack.c.l.b16 %v26
    %v122 = vunpack.c.h.b16 %v26
    %v123 = vunpack.c.l.b16 %v27
    %v124 = vunpack.c.h.b16 %v27
    %v125 = vunpack.c.l.b16 %v28
    %v126 = vunpack.c.h.b16 %v28
    %v127 = vunpack.c.l.b16 %v29
    %v128 = vunpack.c.h.b16 %v29
    %v129 = vunpack.c.l.b16 %v30
    %v130 = vunpack.c.h.b16 %v30
    %v131 = vunpack.c.l.b16 %v31
    %v132 = vunpack.c.h.b16 %v31
    %v133 = vunpack.c.l.b16 %v32
    %v134 = vunpack.c.h.b16 %v32
    %v135 = vunpack.c.l.b16 %v33
    %v136 = vunpack.c.h.b16 %v33
    %v137 = vunpack.c.l.b16 %v34
    %v138 = vunpack.c.h.b16 %v34
    %v139 = vunpack.c.l.b16 %v35
    %v140 = vunpack.c.h.b16 %v35
    %v141 = vunpack.c.l.b16 %v36
    %v142 = vunpack.c.h.b16 %v36
    %v143 = vunpack.c.l.b16 %v37
    %v144 = vunpack.c.h.b16 %v37
    %v145 = vunpack.c.l.b16 %v38
    %v146 = vunpack.c.h.b16 %v38
    %v147 = vunpack.c.l.b16 %v39
    %v148 = vunpack.c.h.b16 %v39
    %v149 = vunpack.c.l.b16 %v40
    %v150 = vunpack.c.h.b16 %v40
    %v151 = vunpack.c.l.b16 %v41
    %v152 = vunpack.c.h.b16 %v41
    %v153 = vunpack.c.l.b16 %v42
    %v154 = vunpack.c.h.b16 %v42
    %v155 = vunpack.c.l.b16 %v43
    %v156 = vunpack.c.h.b16 %v43
    %v157 = vunpack.c.l.b16 %v44
    %v158 = vunpack.c.h.b16 %v44
    %v159 = vunpack.c.l.b16 %v45
    %v160 = vunpack.c.h.b16 %v45
    %v161 = vunpack.c.l.b16 %v46
    %v162 = vunpack.c.h.b16 %v46
    %v163 = vunpack.c.l.b16 %v47
    %v164 = vunpack.c.h.b16 %v47
    %v165 = vunpack.c.l.b16 %v48
    %v166 = vunpack.c.h.b16 %v48
    %v167 = vpack.c.b16 %v105, %v103
    %v168 = vpack.c.b16 %v106, %v104
    %v169 = vpack.c.b16 %v109, %v107
    %v170 = vpack.c.b16 %v110, %v108
    %v171 = vpack.c.b16 %v113, %v111
    %v172 = vpack.c.b16 %v114, %v112
    %v173 = vpack.c.b16 %v117, %v115
    %v174 = vpack.c.b16 %v118, %v116
    %v175 = vpack.c.b16 %v121, %v119
    %v176 = vpack.c.b16 %v122, %v120
    %v177 = vpack.c.b16 %v125, %v123
    %v178 = vpack.c.b16 %v126, %v124
    %v179 = vpack.c.b16 %v129, %v127
    %v180 = vpack.c.b16 %v130, %v128
    %v181 = vpack.c.b16 %v133, %v131
    %v182 = vpack.c.b16 %v134, %v132
    %v183 = vpack.c.b16 %v137, %v135
    %v184 = vpack.c.b16 %v138, %v136
    %v185 = vpack.c.b16 %v141, %v139
    %v186 = vpack.c.b16 %v142, %v140
    %v187 = vpack.c.b16 %v145, %v143
    %v188 = vpack.c.b16 %v146, %v144
    %v189 = vpack.c.b16 %v149, %v147
    %v190 = vpack.c.b16 %v150, %v148
    %v191 = vpack.c.b16 %v153, %v151
    %v192 = vpack.c.b16 %v154, %v152
    %v193 = vpack.c.b16 %v157, %v155
    %v194 = vpack.c.b16 %v158, %v156
    %v195 = vpack.c.b16 %v161, %v159
    %v196 = vpack.c.b16 %v162, %v160
    %v197 = vpack.c.b16 %v165, %v163
    %v198 = vpack.c.b16 %v166, %v164
    %231 = vmatprep.subr.bf16.mxu0 %v168
    %232 = vmatpush1.bf16.msra.mxu0 %v167
    %233 = vmatprep.subr.bf16.mxu0 %v170
    %234 = vmatpush1.bf16.msra.mxu0 %v169
    %235 = vmatprep.subr.bf16.mxu0 %v172
    %236 = vmatpush1.bf16.msra.mxu0 %v171
    %237 = vmatprep.subr.bf16.mxu0 %v174
    %238 = vmatpush1.bf16.msra.mxu0 %v173
    %239 = vmatprep.subr.bf16.mxu0 %v176
    %240 = vmatpush1.bf16.msra.mxu0 %v175
    %241 = vmatprep.subr.bf16.mxu0 %v178
    %242 = vmatpush1.bf16.msra.mxu0 %v177
    %243 = vmatprep.subr.bf16.mxu0 %v180
    %244 = vmatpush1.bf16.msra.mxu0 %v179
    %245 = vmatprep.subr.bf16.mxu0 %v182
    %246 = vmatpush1.bf16.msra.mxu0 %v181
    %247 = vmatprep.subr.bf16.mxu0 %v184
    %248 = vmatpush1.bf16.msra.mxu0 %v183
    %249 = vmatprep.subr.bf16.mxu0 %v186
    %250 = vmatpush1.bf16.msra.mxu0 %v185
    %251 = vmatprep.subr.bf16.mxu0 %v188
    %252 = vmatpush1.bf16.msra.mxu0 %v187
    %253 = vmatprep.subr.bf16.mxu0 %v190
    %254 = vmatpush1.bf16.msra.mxu0 %v189
    %255 = vmatprep.subr.bf16.mxu0 %v192
    %256 = vmatpush1.bf16.msra.mxu0 %v191
    %257 = vmatprep.subr.bf16.mxu0 %v194
    %258 = vmatpush1.bf16.msra.mxu0 %v193
    %259 = vmatprep.subr.bf16.mxu0 %v196
    %260 = vmatpush1.bf16.msra.mxu0 %v195
    %261 = vmatprep.subr.bf16.mxu0 %v198
    %262 = vmatpush1.bf16.msra.mxu0 %v197
    %263 = vmatprep.mubr.bf16.mxu0 %v68
    %264 = vmatmul.mubr.bf16.gmra.mrb[0].mxu0 %v67
    %v265 = vpop.f32.mrb[0].mxu0
    %v266 = vadd.f32 %v54, %v265
    %v267 = vpop.f32.mrb[0].mxu0
    %v268 = vadd.f32 %v58, %v267
    %v269 = vpop.f32.mrb[0].mxu0
    %v270 = vadd.f32 %v54, %v269
    %v271 = vpop.f32.mrb[0].mxu0
    %v272 = vadd.f32 %v58, %v271
    %273 = vdwg.mxu0
    %274 = vst [vmem:[#allocation2] sm:$0xff] %v266
    %275 = vst [vmem:[#allocation2 + $0x8] sm:$0xff] %v268
    %276 = vst [vmem:[#allocation2 + $0x10] sm:$0xff] %v270
    %277 = vst [vmem:[#allocation2 + $0x18] sm:$0xff] %v272
    // Predicated region
    $region14: #{projector_forward.5} parent=1 // pred_check
      _
    $region15: #{projector_forward.5} parent=1 // pred_check_branch
      %279 = sbr.rel (0) target = $region17
    $region16: #{projector_forward.5} parent=1 // pred_region
      %s281 = ssub.s32 512, 512
      %282 = vsyncadd [#allocation3], %s281
      %s283 = sshll.u32 [#allocation2], 4
      %s284 = int_to_ptr.vmem [resolvable:$true] %s283
      %289 = dma.vmem_to_hbm [thread:$0]  %s284, 512, %s3, [#allocation3], 256, 256, 16
    $region17: #{projector_forward.5} parent=1 // pred_fallthru
      _
    // Predicated region
    $region18: #{projector_forward.5} parent=1 // pred_check
      _
    $region19: #{projector_forward.5} parent=1 // pred_check_branch
      %291 = sbr.rel (0) target = $region21
    $region20: #{projector_forward.5} parent=1 // pred_region
      %292 = dma.done [#allocation3], 512
    $region21: #{projector_forward.5} parent=1 // pred_fallthru
      _
    %293 = vsyncpa [#allocation3], 1

// kernel: projector_forward.4
$region0: #{projector_forward.4}
  #allocation0 [shape = 'u32[]', space=smem, size = 0x4, offset = 0x4, fixed_abs, tag = 'smem constant byte address 0x4 - core index']
  #allocation1 [shape = 'u32[144,128]{1,0:T(1,128)}', space=vmem, size = 0x12000, scoped, tag = 'internal scratch']
  %s0 = inlined_call_operand.vmem [shape: bf16[16,256], index: 0, kind: input, shape index: {}]
  %s1 = inlined_call_operand.vmem [shape: bf16[256,256], index: 1, kind: input, shape index: {}]
  %s2 = inlined_call_operand.vmem [shape: f32[1,256], index: 2, kind: input, shape index: {}]
  %s3 = inlined_call_operand.vmem [shape: f32[1,256], index: 3, kind: input, shape index: {}]
  %s4 = inlined_call_operand.vmem [shape: bf16[16,256], index: 4, kind: output, shape index: {}]
  %s5 = sld [smem:[#allocation0]]
  $region26: #{projector_forward.4} parent=0
    _
  %s7 = ssub.s32 1, %s5
  %s8 = scalar_select 0, %s7, %s5
  // Predicated region
  $region2: #{projector_forward.4} parent=0 // pred_check
    _
  $region3: #{projector_forward.4} parent=0 // pred_check_branch
    %10 = sbr.rel (0) target = $region5
  $region4: #{projector_forward.4} parent=0 // pred_region
    _
  $region5: #{projector_forward.4} parent=0 // pred_fallthru
    _
  // Predicated region
  $region6: #{projector_forward.4} parent=0 // pred_check
    _
  $region7: #{projector_forward.4} parent=0 // pred_check_branch
    %12 = sbr.rel (0) target = $region9
  $region8: #{projector_forward.4} parent=0 // pred_region
    _
  $region9: #{projector_forward.4} parent=0 // pred_fallthru
    _
  // Predicated region
  $region10: #{projector_forward.4} parent=0 // pred_check
    _
  $region11: #{projector_forward.4} parent=0 // pred_check_branch
    %14 = sbr.rel (0) target = $region13
  $region12: #{projector_forward.4} parent=0 // pred_region
    _
  $region13: #{projector_forward.4} parent=0 // pred_fallthru
    _
  // Predicated region
  $region14: #{projector_forward.4} parent=0 // pred_check
    _
  $region15: #{projector_forward.4} parent=0 // pred_check_branch
    %16 = sbr.rel (0) target = $region17
  $region16: #{projector_forward.4} parent=0 // pred_region
    _
  $region17: #{projector_forward.4} parent=0 // pred_fallthru
    _
  %v17 = vld [vmem:[%s0] sm:$0xff]
  %v18 = vld [vmem:[%s0 + $0x8] sm:$0xff]
  %v19 = vld [vmem:[%s1] sm:$0xff]
  %v20 = vld [vmem:[%s1 + $0x8] sm:$0xff]
  %v21 = vld [vmem:[%s1 + $0x10] sm:$0xff]
  %v22 = vld [vmem:[%s1 + $0x18] sm:$0xff]
  %v23 = vld [vmem:[%s1 + $0x20] sm:$0xff]
  %v24 = vld [vmem:[%s1 + $0x28] sm:$0xff]
  %v25 = vld [vmem:[%s1 + $0x30] sm:$0xff]
  %v26 = vld [vmem:[%s1 + $0x38] sm:$0xff]
  %v27 = vld [vmem:[%s1 + $0x40] sm:$0xff]
  %v28 = vld [vmem:[%s1 + $0x48] sm:$0xff]
  %v29 = vld [vmem:[%s1 + $0x50] sm:$0xff]
  %v30 = vld [vmem:[%s1 + $0x58] sm:$0xff]
  %v31 = vld [vmem:[%s1 + $0x60] sm:$0xff]
  %v32 = vld [vmem:[%s1 + $0x68] sm:$0xff]
  %v33 = vld [vmem:[%s1 + $0x70] sm:$0xff]
  %v34 = vld [vmem:[%s1 + $0x78] sm:$0xff]
  %v35 = vld [vmem:[%s1 + $0x80] sm:$0xff]
  %v36 = vld [vmem:[%s1 + $0x88] sm:$0xff]
  %v37 = vld [vmem:[%s1 + $0x90] sm:$0xff]
  %v38 = vld [vmem:[%s1 + $0x98] sm:$0xff]
  %v39 = vld [vmem:[%s1 + $0xa0] sm:$0xff]
  %v40 = vld [vmem:[%s1 + $0xa8] sm:$0xff]
  %v41 = vld [vmem:[%s1 + $0xb0] sm:$0xff]
  %v42 = vld [vmem:[%s1 + $0xb8] sm:$0xff]
  %v43 = vld [vmem:[%s1 + $0xc0] sm:$0xff]
  %v44 = vld [vmem:[%s1 + $0xc8] sm:$0xff]
  %v45 = vld [vmem:[%s1 + $0xd0] sm:$0xff]
  %v46 = vld [vmem:[%s1 + $0xd8] sm:$0xff]
  %v47 = vld [vmem:[%s1 + $0xe0] sm:$0xff]
  %v48 = vld [vmem:[%s1 + $0xe8] sm:$0xff]
  %v49 = vld [vmem:[%s1 + $0xf0] sm:$0xff]
  %v50 = vld [vmem:[%s1 + $0xf8] sm:$0xff]
  %v53 = vunpack.c.l.b16 %v17
  %v54 = vunpack.c.h.b16 %v17
  %v55 = vunpack.c.l.b16 %v18
  %v56 = vunpack.c.h.b16 %v18
  %v57 = vpack.c.b16 %v55, %v53
  %v58 = vpack.c.b16 %v56, %v54
  %v93 = vunpack.c.l.b16 %v19
  %v94 = vunpack.c.h.b16 %v19
  %v95 = vunpack.c.l.b16 %v20
  %v96 = vunpack.c.h.b16 %v20
  %v97 = vunpack.c.l.b16 %v21
  %v98 = vunpack.c.h.b16 %v21
  %v99 = vunpack.c.l.b16 %v22
  %v100 = vunpack.c.h.b16 %v22
  %v101 = vunpack.c.l.b16 %v23
  %v102 = vunpack.c.h.b16 %v23
  %v103 = vunpack.c.l.b16 %v24
  %v104 = vunpack.c.h.b16 %v24
  %v105 = vunpack.c.l.b16 %v25
  %v106 = vunpack.c.h.b16 %v25
  %v107 = vunpack.c.l.b16 %v26
  %v108 = vunpack.c.h.b16 %v26
  %v109 = vunpack.c.l.b16 %v27
  %v110 = vunpack.c.h.b16 %v27
  %v111 = vunpack.c.l.b16 %v28
  %v112 = vunpack.c.h.b16 %v28
  %v113 = vunpack.c.l.b16 %v29
  %v114 = vunpack.c.h.b16 %v29
  %v115 = vunpack.c.l.b16 %v30
  %v116 = vunpack.c.h.b16 %v30
  %v117 = vunpack.c.l.b16 %v31
  %v118 = vunpack.c.h.b16 %v31
  %v119 = vunpack.c.l.b16 %v32
  %v120 = vunpack.c.h.b16 %v32
  %v121 = vunpack.c.l.b16 %v33
  %v122 = vunpack.c.h.b16 %v33
  %v123 = vunpack.c.l.b16 %v34
  %v124 = vunpack.c.h.b16 %v34
  %v125 = vunpack.c.l.b16 %v35
  %v126 = vunpack.c.h.b16 %v35
  %v127 = vunpack.c.l.b16 %v36
  %v128 = vunpack.c.h.b16 %v36
  %v129 = vunpack.c.l.b16 %v37
  %v130 = vunpack.c.h.b16 %v37
  %v131 = vunpack.c.l.b16 %v38
  %v132 = vunpack.c.h.b16 %v38
  %v133 = vunpack.c.l.b16 %v39
  %v134 = vunpack.c.h.b16 %v39
  %v135 = vunpack.c.l.b16 %v40
  %v136 = vunpack.c.h.b16 %v40
  %v137 = vunpack.c.l.b16 %v41
  %v138 = vunpack.c.h.b16 %v41
  %v139 = vunpack.c.l.b16 %v42
  %v140 = vunpack.c.h.b16 %v42
  %v141 = vunpack.c.l.b16 %v43
  %v142 = vunpack.c.h.b16 %v43
  %v143 = vunpack.c.l.b16 %v44
  %v144 = vunpack.c.h.b16 %v44
  %v145 = vunpack.c.l.b16 %v45
  %v146 = vunpack.c.h.b16 %v45
  %v147 = vunpack.c.l.b16 %v46
  %v148 = vunpack.c.h.b16 %v46
  %v149 = vunpack.c.l.b16 %v47
  %v150 = vunpack.c.h.b16 %v47
  %v151 = vunpack.c.l.b16 %v48
  %v152 = vunpack.c.h.b16 %v48
  %v153 = vunpack.c.l.b16 %v49
  %v154 = vunpack.c.h.b16 %v49
  %v155 = vunpack.c.l.b16 %v50
  %v156 = vunpack.c.h.b16 %v50
  %v157 = vpack.c.b16 %v95, %v93
  %v158 = vpack.c.b16 %v96, %v94
  %v159 = vpack.c.b16 %v99, %v97
  %v160 = vpack.c.b16 %v100, %v98
  %v161 = vpack.c.b16 %v103, %v101
  %v162 = vpack.c.b16 %v104, %v102
  %v163 = vpack.c.b16 %v107, %v105
  %v164 = vpack.c.b16 %v108, %v106
  %v165 = vpack.c.b16 %v111, %v109
  %v166 = vpack.c.b16 %v112, %v110
  %v167 = vpack.c.b16 %v115, %v113
  %v168 = vpack.c.b16 %v116, %v114
  %v169 = vpack.c.b16 %v119, %v117
  %v170 = vpack.c.b16 %v120, %v118
  %v171 = vpack.c.b16 %v123, %v121
  %v172 = vpack.c.b16 %v124, %v122
  %v173 = vpack.c.b16 %v127, %v125
  %v174 = vpack.c.b16 %v128, %v126
  %v175 = vpack.c.b16 %v131, %v129
  %v176 = vpack.c.b16 %v132, %v130
  %v177 = vpack.c.b16 %v135, %v133
  %v178 = vpack.c.b16 %v136, %v134
  %v179 = vpack.c.b16 %v139, %v137
  %v180 = vpack.c.b16 %v140, %v138
  %v181 = vpack.c.b16 %v143, %v141
  %v182 = vpack.c.b16 %v144, %v142
  %v183 = vpack.c.b16 %v147, %v145
  %v184 = vpack.c.b16 %v148, %v146
  %v185 = vpack.c.b16 %v151, %v149
  %v186 = vpack.c.b16 %v152, %v150
  %v187 = vpack.c.b16 %v155, %v153
  %v188 = vpack.c.b16 %v156, %v154
  %221 = vmatprep.subr.bf16.mxu0 %v158
  %222 = vmatpush1.bf16.msra.mxu0 %v157
  %223 = vmatprep.subr.bf16.mxu0 %v160
  %224 = vmatpush1.bf16.msra.mxu0 %v159
  %225 = vmatprep.subr.bf16.mxu0 %v162
  %226 = vmatpush1.bf16.msra.mxu0 %v161
  %227 = vmatprep.subr.bf16.mxu0 %v164
  %228 = vmatpush1.bf16.msra.mxu0 %v163
  %229 = vmatprep.subr.bf16.mxu0 %v166
  %230 = vmatpush1.bf16.msra.mxu0 %v165
  %231 = vmatprep.subr.bf16.mxu0 %v168
  %232 = vmatpush1.bf16.msra.mxu0 %v167
  %233 = vmatprep.subr.bf16.mxu0 %v170
  %234 = vmatpush1.bf16.msra.mxu0 %v169
  %235 = vmatprep.subr.bf16.mxu0 %v172
  %236 = vmatpush1.bf16.msra.mxu0 %v171
  %237 = vmatprep.subr.bf16.mxu0 %v174
  %238 = vmatpush1.bf16.msra.mxu0 %v173
  %239 = vmatprep.subr.bf16.mxu0 %v176
  %240 = vmatpush1.bf16.msra.mxu0 %v175
  %241 = vmatprep.subr.bf16.mxu0 %v178
  %242 = vmatpush1.bf16.msra.mxu0 %v177
  %243 = vmatprep.subr.bf16.mxu0 %v180
  %244 = vmatpush1.bf16.msra.mxu0 %v179
  %245 = vmatprep.subr.bf16.mxu0 %v182
  %246 = vmatpush1.bf16.msra.mxu0 %v181
  %247 = vmatprep.subr.bf16.mxu0 %v184
  %248 = vmatpush1.bf16.msra.mxu0 %v183
  %249 = vmatprep.subr.bf16.mxu0 %v186
  %250 = vmatpush1.bf16.msra.mxu0 %v185
  %251 = vmatprep.subr.bf16.mxu0 %v188
  %252 = vmatpush1.bf16.msra.mxu0 %v187
  %253 = vmatprep.mubr.bf16.mxu0 %v58
  %254 = vmatmul.mubr.bf16.gmra.mrb[0].mxu0 %v57
  %v255 = vpop.f32.mrb[0].mxu0
  %v256 = vadd.f32 0.0, %v255
  %v257 = vpop.f32.mrb[0].mxu0
  %v258 = vadd.f32 0.0, %v257
  %v259 = vpop.f32.mrb[0].mxu0
  %v260 = vadd.f32 0.0, %v259
  %v261 = vpop.f32.mrb[0].mxu0
  %v262 = vadd.f32 0.0, %v261
  %263 = vdwg.mxu0
  %v264 = vlaneseq
  %v265 = vshrl.u32 %v264, 7
  %v266 = vadd.s32 %v265, 8
  %vm267 = vcmp.lt.s32.totalorder %v265, 12
  %vm268 = vcmp.lt.s32.totalorder %v266, 12
  %v269 = vsel %vm267, 1, 0
  %v270 = vsel %vm268, 1, 0
  %v271 = vcvt.s32.f32 %v269
  %v272 = vcvt.s32.f32 %v270
  %v273 = vmul.f32 %v256, %v271
  %v274 = vmul.f32 %v258, %v271
  %v275 = vmul.f32 %v260, %v272
  %v276 = vmul.f32 %v262, %v272
  %v277 = vadd.f32 %v273, %v275
  %v278 = vrot.slane %v277, 4
  %v279 = vadd.f32 %v277, %v278
  %v280 = vrot.slane %v279, 2
  %v281 = vadd.f32 %v279, %v280
  %v282 = vrot.slane %v281, 1
  %v283 = vadd.f32 %v281, %v282
  %v284 = vadd.f32 %v274, %v276
  %v285 = vrot.slane %v284, 4
  %v286 = vadd.f32 %v284, %v285
  %v287 = vrot.slane %v286, 2
  %v288 = vadd.f32 %v286, %v287
  %v289 = vrot.slane %v288, 1
  %v290 = vadd.f32 %v288, %v289
  %v291 = vmul.f32 %v283, 0.083333336
  %v292 = vmul.f32 %v290, 0.083333336
  %v293 = vsub.f32 %v256, %v291
  %v294 = vsub.f32 %v258, %v292
  %v295 = vsub.f32 %v260, %v291
  %v296 = vsub.f32 %v262, %v292
  %v297 = vmul.f32 %v293, %v271
  %v298 = vmul.f32 %v294, %v271
  %v299 = vmul.f32 %v295, %v272
  %v300 = vmul.f32 %v296, %v272
  %v301 = vmul.f32 %v297, %v297
  %v302 = vmul.f32 %v298, %v298
  %v303 = vmul.f32 %v299, %v299
  %v304 = vmul.f32 %v300, %v300
  %v305 = vadd.f32 %v301, %v303
  %v306 = vrot.slane %v305, 4
  %v307 = vadd.f32 %v305, %v306
  %v308 = vrot.slane %v307, 2
  %v309 = vadd.f32 %v307, %v308
  %v310 = vrot.slane %v309, 1
  %v311 = vadd.f32 %v309, %v310
  %v312 = vadd.f32 %v302, %v304
  %v313 = vrot.slane %v312, 4
  %v314 = vadd.f32 %v312, %v313
  %v315 = vrot.slane %v314, 2
  %v316 = vadd.f32 %v314, %v315
  %v317 = vrot.slane %v316, 1
  %v318 = vadd.f32 %v316, %v317
  %v319 = vmul.f32 %v311, 0.083333336
  %v320 = vmul.f32 %v318, 0.083333336
  %v321 = vld [vmem:[%s2] sm:$0x3]
  %v322 = vadd.f32 %v319, 1e-05
  %v323 = vadd.f32 %v320, 1e-05
  %v324 = vrsqrt.pop %v322
  %v325 = vrsqrt.pop %v323
  %v328 = vcombine.low %v324, %v325
  %v330 = vunpack.c.l.s4 1966171168
  %v331 = vunpack.c.0.s8 %v330
  %v332 = vlaneseq
  %v333 = vshrl.u32 %v332, 7
  %v334 = vsub.s32 %v331, %v333
  %v335 = vrot.slane %v328, %v334
  %v337 = vunpack.c.l.s4 1966171168
  %v338 = vunpack.c.0.s8 %v337
  %v339 = vlaneseq
  %v340 = vshrl.u32 %v339, 7
  %v341 = vsub.s32 %v338, %v340
  %v342 = vrot.slane %v335, %v341
  %v344 = vmul.f32 %v321, %v342
  %v345 = vld [vmem:[%s3] sm:$0x3]
  %v347 = vlaneseq
  %v348 = vshrl.u32 %v347, 7
  %v349 = vsub.s32 0, %v348
  %v350 = vrot.slane %v344, %v349
  %v351 = vlaneseq
  %v352 = vshrl.u32 %v351, 7
  %v353 = vsub.s32 1, %v352
  %v354 = vrot.slane %v344, %v353
  %v357 = vmul.f32 %v291, %v350
  %v358 = vmul.f32 %v292, %v354
  %v361 = vcombine.low %v357, %v358
  %v363 = vunpack.c.l.s4 1966171168
  %v364 = vunpack.c.0.s8 %v363
  %v365 = vlaneseq
  %v366 = vshrl.u32 %v365, 7
  %v367 = vsub.s32 %v364, %v366
  %v368 = vrot.slane %v361, %v367
  %v370 = vunpack.c.l.s4 1966171168
  %v371 = vunpack.c.0.s8 %v370
  %v372 = vlaneseq
  %v373 = vshrl.u32 %v372, 7
  %v374 = vsub.s32 %v371, %v373
  %v375 = vrot.slane %v368, %v374
  %v377 = vsub.f32 %v345, %v375
  %v378 = vmul.f32 %v256, %v350
  %v379 = vmul.f32 %v258, %v354
  %v380 = vmul.f32 %v260, %v350
  %v381 = vmul.f32 %v262, %v354
  %v383 = vlaneseq
  %v384 = vshrl.u32 %v383, 7
  %v385 = vsub.s32 0, %v384
  %v386 = vrot.slane %v377, %v385
  %v387 = vlaneseq
  %v388 = vshrl.u32 %v387, 7
  %v389 = vsub.s32 1, %v388
  %v390 = vrot.slane %v377, %v389
  %v393 = vadd.f32 %v378, %v386
  %v394 = vadd.f32 %v379, %v390
  %v395 = vadd.f32 %v380, %v386
  %v396 = vadd.f32 %v381, %v390
  %v397 = vmax.f32 %v393, 0.0
  %v398 = vmax.f32 %v394, 0.0
  %v399 = vmax.f32 %v395, 0.0
  %v400 = vmax.f32 %v396, 0.0
  %v401 = vpack.c.bf16 %v399, %v397
  %v402 = vpack.c.bf16 %v400, %v398
  %v405 = vunpack.c.l.b16 %v401
  %v406 = vunpack.c.l.b16 %v402
  %v407 = vunpack.c.h.b16 %v401
  %v408 = vunpack.c.h.b16 %v402
  %v409 = vpack.c.b16 %v406, %v405
  %v410 = vpack.c.b16 %v408, %v407
  %413 = vst [vmem:[%s4] sm:$0xff] %v409
  %414 = vst [vmem:[%s4 + $0x8] sm:$0xff] %v410
  // Predicated region
  $region18: #{projector_forward.4} parent=0 // pred_check
    _
  $region19: #{projector_forward.4} parent=0 // pred_check_branch
    %416 = sbr.rel (0) target = $region21
  $region20: #{projector_forward.4} parent=0 // pred_region
    _
  $region21: #{projector_forward.4} parent=0 // pred_fallthru
    _
  // Predicated region
  $region22: #{projector_forward.4} parent=0 // pred_check
    _
  $region23: #{projector_forward.4} parent=0 // pred_check_branch
    %418 = sbr.rel (0) target = $region25
  $region24: #{projector_forward.4} parent=0 // pred_region
    _
  $region25: #{projector_forward.4} parent=0 // pred_fallthru
    _

</llo_original>
